<compile_context>
chip_gen: v7x
topology: tpu7x:2x2x1
jax: 0.10.0
libtpu: 0.0.40
codegen_flags: <defaults>
</compile_context>

<pallas_src>
import functools

import jax
import jax.numpy as jnp
from jax import lax
from jax.experimental import pallas as pl
from jax.experimental.pallas import tpu as pltpu
import numpy as np

# ----------------------------- configuration -----------------------------
B = 2            # batch
T = 16           # sequence length
CIN = 1          # input channels (Close price only)
C0, C1 = 16, 32  # num_channels = [16, 32]
K = 3            # kernel_size
EMB = 64         # emb_dim
OUT_ROWS = 8     # sublane-padded output rows (>= B) -> unmasked store
OUT_LANES = 128  # lane-dense output width (wrapper slices back to EMB)
BT = B * T


# --------------------------- in-kernel helpers ----------------------------
def _shift_rows(h, s, tmod):
    """Causal shift on the flat (B*T, C) layout: out[r] = h[r - s], zeroed where
    the within-sequence index (r % T) < s (so batches never bleed into each other)."""
    if s == 0:
        return h
    rolled = pltpu.roll(h, shift=s, axis=0)
    return jnp.where(tmod >= s, rolled, 0.0)


def _shifted_stack(h, d, tmod):
    """Stack the K=3 causal taps along lanes: [shift 2d | shift d | shift 0].
    Matches the fused (K*Cin, Cout) weight layout built in init_params."""
    return jnp.concatenate(
        [_shift_rows(h, 2 * d, tmod), _shift_rows(h, d, tmod), h], axis=1)


# ------------------------------- kernel ----------------------------------
def tcn_kernel(x_ref, slab_ref, out_ref, *, offs):
    relu = lambda v: jnp.maximum(v, 0.0)
    sl = lambda name, rows, lanes: slab_ref[offs[name]: offs[name] + rows, :lanes]

    # hoisted causal-mask iotas (one per activation width)
    tmod16 = lax.broadcasted_iota(jnp.int32, (BT, C0), 0) % T
    tmod32 = lax.broadcasted_iota(jnp.int32, (BT, C1), 0) % T

    # input: (B*T, 1) -> broadcast once across C0 lanes (Cin==1, pure VPU path)
    x16 = jnp.broadcast_to(x_ref[...], (BT, C0))

    # ---- TemporalBlock 0 (dilation=1) ; dropout = identity ----
    # conv1: Cin=1 -> C0 via broadcast multiplies (no MXU); taps read in ONE load
    w10 = sl("w1_0", K, C0)                                    # (3, C0)
    b10 = sl("b1_0", 1, C0)
    h = (b10
         + _shift_rows(x16, 2, tmod16) * w10[0:1, :]
         + _shift_rows(x16, 1, tmod16) * w10[1:2, :]
         + x16 * w10[2:3, :])
    h = relu(h)

    # conv2: C0 -> C0, all K taps fused into one (BT, 3*C0) @ (3*C0, C0) matmul
    h = relu(jnp.dot(_shifted_stack(h, 1, tmod16), sl("w2_0", K * C0, C0),
                     preferred_element_type=jnp.float32) + sl("b2_0", 1, C0))

    # residual 1x1 conv from Cin=1: broadcast multiply
    y0 = relu(h + x16 * sl("wd0", 1, C0) + sl("bd0", 1, C0))   # (BT, C0)

    # ---- TemporalBlock 1 (dilation=2) ----
    # conv1 + residual 1x1 (C0->C1) fused into ONE matmul: weight is (3*C0, 2*C1),
    # lanes 0:C1 = conv1 taps, lanes C1:2*C1 rows 2*C0:3*C0 = wd1
    # (the shift-0 tap of the stacked input is exactly y0).
    fused = jnp.dot(_shifted_stack(y0, 2, tmod16), sl("w11f", K * C0, 2 * C1),
                    preferred_element_type=jnp.float32)        # (BT, 2*C1)
    h = relu(fused[:, :C1] + sl("b1_1", 1, C1))
    res = fused[:, C1:2 * C1] + sl("bd1", 1, C1)

    # conv2: C1 -> C1
    h = relu(jnp.dot(_shifted_stack(h, 2, tmod32), sl("w2_1", K * C1, C1),
                     preferred_element_type=jnp.float32) + sl("b2_1", 1, C1))
    y1 = relu(h + res)                                         # (BT, C1)

    # ---- per-batch temporal mean (matmul with a row-padded averaging matrix) ----
    feat = jnp.dot(sl("avg", OUT_ROWS, BT), y1,
                   preferred_element_type=jnp.float32)         # (8, C1)

    # ---- lane-padded projection -> unmasked (8, 128) store ----
    out_ref[...] = (jnp.dot(feat, sl("wp", C1, OUT_LANES),
                            preferred_element_type=jnp.float32)
                    + sl("bp", 1, OUT_LANES))


# ------------------------------- wrapper ----------------------------------
def tcn_encoder_pallas(x_ncl, params):
    """x_ncl: (B, 1, T) float32 (PyTorch NCL layout). Returns (B, EMB)."""
    b, cin, t = x_ncl.shape
    assert (b, cin, t) == (B, CIN, T)
    kp = params["kernel"]

    # NCL -> flat time-major (B*T, 1)
    x_flat = jnp.transpose(x_ncl, (0, 2, 1)).reshape(BT, CIN)

    kernel = functools.partial(tcn_kernel, offs=kp["offs"])

    # Gridless call: single invocation over the whole batch, operands fully
    # resident in VMEM (no pipeline scaffolding / double buffering).
    # TODO(synk): for many independent windows, add a leading grid axis over
    # window tiles (marked "parallel") so one pallas_call amortizes launch/DMA.
    full = pl.pallas_call(
        kernel,
        out_shape=jax.ShapeDtypeStruct((OUT_ROWS, OUT_LANES), jnp.float32),
        in_specs=[pl.BlockSpec(memory_space=pltpu.MemorySpace.VMEM),
                  pl.BlockSpec(memory_space=pltpu.MemorySpace.VMEM)],
        out_specs=pl.BlockSpec(memory_space=pltpu.MemorySpace.VMEM),
    )(x_flat, kp["slab"])

    return full[:B, :EMB]                                      # drop padding


# -------------------------- parameter creation ----------------------------
def init_params(key):
    """PyTorch-shaped params + a single packed 128-lane slab the kernel uses."""
    ks = jax.random.split(key, 14)
    n = lambda k, shape, s=0.1: s * jax.random.normal(k, shape, jnp.float32)

    torch_p = {
        # block 0: Conv1d(1,16,3), Conv1d(16,16,3), downsample Conv1d(1,16,1)
        "w1_0": n(ks[0], (C0, CIN, K)),  "b1_0": n(ks[1], (C0,)),
        "w2_0": n(ks[2], (C0, C0, K)),   "b2_0": n(ks[3], (C0,)),
        "wd_0": n(ks[4], (C0, CIN, 1)),  "bd_0": n(ks[5], (C0,)),
        # block 1: Conv1d(16,32,3), Conv1d(32,32,3), downsample Conv1d(16,32,1)
        "w1_1": n(ks[6], (C1, C0, K)),   "b1_1": n(ks[7], (C1,)),
        "w2_1": n(ks[8], (C1, C1, K)),   "b2_1": n(ks[9], (C1,)),
        "wd_1": n(ks[10], (C1, C0, 1)),  "bd_1": n(ks[11], (C1,)),
        # proj: Linear(32, 64)
        "wp": n(ks[12], (EMB, C1)),      "bp": n(ks[13], (EMB,)),
    }

    def fused_taps(w):  # (Cout, Cin, K) -> (K*Cin, Cout): rows [tap0.T; tap1.T; tap2.T]
        co, ci, k = w.shape
        return jnp.transpose(w, (2, 1, 0)).reshape(k * ci, co)

    # block-0 first conv (Cin=1): one weight row per tap, shape (K, C0)
    w1_0_rows = jnp.transpose(torch_p["w1_0"][:, 0, :], (1, 0))          # (3, 16)
    wd0_row = torch_p["wd_0"][:, 0, 0][None, :]                          # (1, 16)

    # block-1 conv1 fused with its residual 1x1 downsample (see kernel comment)
    w11 = fused_taps(torch_p["w1_1"])                                    # (48, 32)
    wd1 = jnp.transpose(torch_p["wd_1"][:, :, 0], (1, 0))                # (16, 32)
    w11f = jnp.concatenate(
        [w11,
         jnp.concatenate([jnp.zeros((2 * C0, C1), jnp.float32), wd1], axis=0)],
        axis=1)                                                          # (48, 64)

    # per-batch temporal averaging matrix, zero-padded to a full 8-row tile
    avg = jnp.repeat(jnp.eye(B, dtype=jnp.float32), T, axis=1) / T       # (B, B*T)
    avg = jnp.pad(avg, ((0, OUT_ROWS - B), (0, 0)))                      # (8, B*T)

    # projection padded to 128 output lanes for a lane-dense store
    wp_pad = jnp.pad(jnp.transpose(torch_p["wp"], (1, 0)),
                     ((0, 0), (0, OUT_LANES - EMB)))                     # (32, 128)
    bp_pad = jnp.pad(torch_p["bp"][None, :], ((0, 0), (0, OUT_LANES - EMB)))

    def pack_rows_128(named):
        """Zero-pad every segment to 128 lanes, 8-row align, row-concatenate."""
        parts, offs, off = [], {}, 0
        for name, a in named:
            r, c = a.shape
            row_pad = (-r) % 8
            offs[name] = off
            parts.append(jnp.pad(a, ((0, row_pad), (0, OUT_LANES - c))))
            off += r + row_pad
        return jnp.concatenate(parts, axis=0), offs

    slab, offs = pack_rows_128([
        ("w1_0", w1_0_rows),
        ("b1_0", torch_p["b1_0"][None, :]),
        ("wd0",  wd0_row),
        ("bd0",  torch_p["bd_0"][None, :]),
        ("w2_0", fused_taps(torch_p["w2_0"])),
        ("b2_0", torch_p["b2_0"][None, :]),
        ("w11f", w11f),
        ("b1_1", torch_p["b1_1"][None, :]),
        ("bd1",  torch_p["bd_1"][None, :]),
        ("w2_1", fused_taps(torch_p["w2_1"])),
        ("b2_1", torch_p["b2_1"][None, :]),
        ("avg",  avg),
        ("wp",   wp_pad),
        ("bp",   bp_pad),
    ])

    return {"torch": torch_p, "kernel": {"slab": slab, "offs": offs}}


# ---------------------- pure-JAX reference (for check) --------------------
def _conv1d_torch_like(x, w, b, dilation, padding):
    """x: (B, Cin, L), w: (Cout, Cin, K) — matches nn.Conv1d + Chomp1d."""
    y = lax.conv_general_dilated(
        x, w, window_strides=(1,), padding=[(padding, padding)],
        rhs_dilation=(dilation,), dimension_numbers=("NCH", "OIH", "NCH"))
    y = y + b[None, :, None]
    if padding > 0:
        y = y[..., :-padding]
    return y


def tcn_encoder_ref(x, tp):
    relu = jax.nn.relu
    # block 0, dilation 1, padding 2
    h = relu(_conv1d_torch_like(x, tp["w1_0"], tp["b1_0"], 1, 2))
    h = relu(_conv1d_torch_like(h, tp["w2_0"], tp["b2_0"], 1, 2))
    res = _conv1d_torch_like(x, tp["wd_0"], tp["bd_0"], 1, 0)
    y0 = relu(h + res)
    # block 1, dilation 2, padding 4
    h = relu(_conv1d_torch_like(y0, tp["w1_1"], tp["b1_1"], 2, 4))
    h = relu(_conv1d_torch_like(h, tp["w2_1"], tp["b2_1"], 2, 4))
    res = _conv1d_torch_like(y0, tp["wd_1"], tp["bd_1"], 1, 0)
    y1 = relu(h + res)
    feat = jnp.mean(y1, axis=2)                        # (B, C1)
    return feat @ tp["wp"].T + tp["bp"]                # (B, EMB)


# --------------------------------- main -----------------------------------
if __name__ == "__main__":
    key = jax.random.PRNGKey(0)
    k_x, k_p = jax.random.split(key)

    x = jax.random.normal(k_x, (B, CIN, T), jnp.float32)   # PyTorch NCL layout
    params = init_params(k_p)

    emb = tcn_encoder_pallas(x, params)
    emb = jax.block_until_ready(emb)
    assert emb.shape == (B, EMB)

    ref = jax.block_until_ready(tcn_encoder_ref(x, params["torch"]))
    np.testing.assert_allclose(np.asarray(emb), np.asarray(ref),
                               rtol=2e-3, atol=2e-3)

    print("KERNEL_OK")
</pallas_src>

<mosaic_0001>
module attributes {stable_mosaic.version = 11 : i64} {
  func.func @tcn_kernel(%arg0: memref<32x1xf32, #tpu.memory_space<vmem>>, %arg1: memref<304x128xf32, #tpu.memory_space<vmem>>, %arg2: memref<8x128xf32, #tpu.memory_space<vmem>>) attributes {dimension_semantics = [], scalar_prefetch = 0 : i64, scratch_operands = 0 : i64, tpu.core_type = #tpu.core_type<tc>} {
    %0 = tpu.iota {dimensions = array<i32: 0>} : vector<32x16xi32>
    %c16_i32 = arith.constant 16 : i32
    %c0_i32 = arith.constant 0 : i32
    %1 = arith.cmpi eq, %c16_i32, %c0_i32 : i32
    %c1_i32 = arith.constant 1 : i32
    %2 = arith.select %1, %c1_i32, %c16_i32 : i32
    %3 = vector.broadcast %2 : i32 to vector<32x16xi32>
    %4 = arith.remsi %0, %3 : vector<32x16xi32>
    %c0_i32_0 = arith.constant 0 : i32
    %5 = vector.broadcast %c0_i32_0 : i32 to vector<32x16xi32>
    %6 = arith.cmpi ne, %4, %5 : vector<32x16xi32>
    %c0_i32_1 = arith.constant 0 : i32
    %7 = vector.broadcast %c0_i32_1 : i32 to vector<32x16xi32>
    %8 = arith.cmpi slt, %4, %7 : vector<32x16xi32>
    %c0_i32_2 = arith.constant 0 : i32
    %9 = arith.cmpi slt, %2, %c0_i32_2 : i32
    %10 = vector.broadcast %9 : i1 to vector<32x16xi1>
    %11 = vector.broadcast %10 : vector<32x16xi1> to vector<32x16xi1>
    %12 = arith.xori %8, %11 : vector<32x16xi1>
    %13 = arith.andi %12, %6 : vector<32x16xi1>
    %14 = vector.broadcast %2 : i32 to vector<32x16xi32>
    %15 = arith.addi %4, %14 : vector<32x16xi32>
    %16 = arith.select %13, %15, %4 : vector<32x16xi1>, vector<32x16xi32>
    %17 = tpu.iota {dimensions = array<i32: 0>} : vector<32x32xi32>
    %c16_i32_3 = arith.constant 16 : i32
    %c0_i32_4 = arith.constant 0 : i32
    %18 = arith.cmpi eq, %c16_i32_3, %c0_i32_4 : i32
    %c1_i32_5 = arith.constant 1 : i32
    %19 = arith.select %18, %c1_i32_5, %c16_i32_3 : i32
    %20 = vector.broadcast %19 : i32 to vector<32x32xi32>
    %21 = arith.remsi %17, %20 : vector<32x32xi32>
    %c0_i32_6 = arith.constant 0 : i32
    %22 = vector.broadcast %c0_i32_6 : i32 to vector<32x32xi32>
    %23 = arith.cmpi ne, %21, %22 : vector<32x32xi32>
    %c0_i32_7 = arith.constant 0 : i32
    %24 = vector.broadcast %c0_i32_7 : i32 to vector<32x32xi32>
    %25 = arith.cmpi slt, %21, %24 : vector<32x32xi32>
    %c0_i32_8 = arith.constant 0 : i32
    %26 = arith.cmpi slt, %19, %c0_i32_8 : i32
    %27 = vector.broadcast %26 : i1 to vector<32x32xi1>
    %28 = vector.broadcast %27 : vector<32x32xi1> to vector<32x32xi1>
    %29 = arith.xori %25, %28 : vector<32x32xi1>
    %30 = arith.andi %29, %23 : vector<32x32xi1>
    %31 = vector.broadcast %19 : i32 to vector<32x32xi32>
    %32 = arith.addi %21, %31 : vector<32x32xi32>
    %33 = arith.select %30, %32, %21 : vector<32x32xi1>, vector<32x32xi32>
    %c0 = arith.constant 0 : index
    %c0_9 = arith.constant 0 : index
    %34 = vector.load %arg0[%c0, %c0_9] : memref<32x1xf32, #tpu.memory_space<vmem>>, vector<32x1xf32>
    %35 = vector.shape_cast %34 : vector<32x1xf32> to vector<32x1xf32>
    %36 = vector.broadcast %35 : vector<32x1xf32> to vector<32x16xf32>
    %c0_10 = arith.constant 0 : index
    %c0_11 = arith.constant 0 : index
    %37 = vector.load %arg1[%c0_10, %c0_11] : memref<304x128xf32, #tpu.memory_space<vmem>>, vector<3x16xf32>
    %c8 = arith.constant 8 : index
    %c0_12 = arith.constant 0 : index
    %38 = vector.load %arg1[%c8, %c0_12] : memref<304x128xf32, #tpu.memory_space<vmem>>, vector<1x16xf32>
    %c2_i32 = arith.constant 2 : i32
    %39 = tpu.dynamic_rotate %36 by %c2_i32 dim 0 : vector<32x16xf32>, i32 -> vector<32x16xf32>
    %c2_i32_13 = arith.constant 2 : i32
    %40 = vector.broadcast %c2_i32_13 : i32 to vector<32x16xi32>
    %41 = arith.cmpi sge, %16, %40 : vector<32x16xi32>
    %cst = arith.constant 0.000000e+00 : f32
    %42 = vector.broadcast %cst : f32 to vector<32x16xf32>
    %43 = arith.select %41, %39, %42 : vector<32x16xi1>, vector<32x16xf32>
    %44 = vector.extract_strided_slice %37 {offsets = [0, 0], sizes = [1, 16], strides = [1, 1]} : vector<3x16xf32> to vector<1x16xf32>
    %45 = vector.broadcast %44 : vector<1x16xf32> to vector<32x16xf32>
    %46 = arith.mulf %43, %45 : vector<32x16xf32>
    %47 = vector.broadcast %38 : vector<1x16xf32> to vector<32x16xf32>
    %48 = arith.addf %47, %46 : vector<32x16xf32>
    %c1_i32_14 = arith.constant 1 : i32
    %49 = tpu.dynamic_rotate %36 by %c1_i32_14 dim 0 : vector<32x16xf32>, i32 -> vector<32x16xf32>
    %c1_i32_15 = arith.constant 1 : i32
    %50 = vector.broadcast %c1_i32_15 : i32 to vector<32x16xi32>
    %51 = arith.cmpi sge, %16, %50 : vector<32x16xi32>
    %cst_16 = arith.constant 0.000000e+00 : f32
    %52 = vector.broadcast %cst_16 : f32 to vector<32x16xf32>
    %53 = arith.select %51, %49, %52 : vector<32x16xi1>, vector<32x16xf32>
    %54 = vector.extract_strided_slice %37 {offsets = [1, 0], sizes = [1, 16], strides = [1, 1]} : vector<3x16xf32> to vector<1x16xf32>
    %55 = vector.broadcast %54 : vector<1x16xf32> to vector<32x16xf32>
    %56 = arith.mulf %53, %55 : vector<32x16xf32>
    %57 = arith.addf %48, %56 : vector<32x16xf32>
    %58 = vector.extract_strided_slice %37 {offsets = [2, 0], sizes = [1, 16], strides = [1, 1]} : vector<3x16xf32> to vector<1x16xf32>
    %59 = vector.broadcast %58 : vector<1x16xf32> to vector<32x16xf32>
    %60 = arith.mulf %36, %59 : vector<32x16xf32>
    %61 = arith.addf %57, %60 : vector<32x16xf32>
    %cst_17 = arith.constant 0.000000e+00 : f32
    %62 = vector.broadcast %cst_17 : f32 to vector<32x16xf32>
    %63 = arith.maximumf %61, %62 : vector<32x16xf32>
    %c2_i32_18 = arith.constant 2 : i32
    %64 = tpu.dynamic_rotate %63 by %c2_i32_18 dim 0 : vector<32x16xf32>, i32 -> vector<32x16xf32>
    %c2_i32_19 = arith.constant 2 : i32
    %65 = vector.broadcast %c2_i32_19 : i32 to vector<32x16xi32>
    %66 = arith.cmpi sge, %16, %65 : vector<32x16xi32>
    %cst_20 = arith.constant 0.000000e+00 : f32
    %67 = vector.broadcast %cst_20 : f32 to vector<32x16xf32>
    %68 = arith.select %66, %64, %67 : vector<32x16xi1>, vector<32x16xf32>
    %c1_i32_21 = arith.constant 1 : i32
    %69 = tpu.dynamic_rotate %63 by %c1_i32_21 dim 0 : vector<32x16xf32>, i32 -> vector<32x16xf32>
    %c1_i32_22 = arith.constant 1 : i32
    %70 = vector.broadcast %c1_i32_22 : i32 to vector<32x16xi32>
    %71 = arith.cmpi sge, %16, %70 : vector<32x16xi32>
    %cst_23 = arith.constant 0.000000e+00 : f32
    %72 = vector.broadcast %cst_23 : f32 to vector<32x16xf32>
    %73 = arith.select %71, %69, %72 : vector<32x16xi1>, vector<32x16xf32>
    %74 = tpu.concatenate %68, %73, %63 in 1 : vector<32x16xf32>, vector<32x16xf32>, vector<32x16xf32> -> vector<32x48xf32>
    %c32 = arith.constant 32 : index
    %c0_24 = arith.constant 0 : index
    %75 = vector.load %arg1[%c32, %c0_24] : memref<304x128xf32, #tpu.memory_space<vmem>>, vector<48x16xf32>
    %cst_25 = arith.constant dense<0.000000e+00> : vector<32x16xf32>
    %76 = tpu.matmul %74, %75, %cst_25 {dimension_numbers = #tpu.dot_dimension_numbers<[1], [0], [0], [1], [0, 0, 1, 1], [], []>} : vector<32x48xf32>, vector<48x16xf32>, vector<32x16xf32> -> vector<32x16xf32>
    %c80 = arith.constant 80 : index
    %c0_26 = arith.constant 0 : index
    %77 = vector.load %arg1[%c80, %c0_26] : memref<304x128xf32, #tpu.memory_space<vmem>>, vector<1x16xf32>
    %78 = vector.broadcast %77 : vector<1x16xf32> to vector<32x16xf32>
    %79 = arith.addf %76, %78 : vector<32x16xf32>
    %cst_27 = arith.constant 0.000000e+00 : f32
    %80 = vector.broadcast %cst_27 : f32 to vector<32x16xf32>
    %81 = arith.maximumf %79, %80 : vector<32x16xf32>
    %c16 = arith.constant 16 : index
    %c0_28 = arith.constant 0 : index
    %82 = vector.load %arg1[%c16, %c0_28] : memref<304x128xf32, #tpu.memory_space<vmem>>, vector<1x16xf32>
    %83 = vector.broadcast %82 : vector<1x16xf32> to vector<32x16xf32>
    %84 = arith.mulf %36, %83 : vector<32x16xf32>
    %85 = arith.addf %81, %84 : vector<32x16xf32>
    %c24 = arith.constant 24 : index
    %c0_29 = arith.constant 0 : index
    %86 = vector.load %arg1[%c24, %c0_29] : memref<304x128xf32, #tpu.memory_space<vmem>>, vector<1x16xf32>
    %87 = vector.broadcast %86 : vector<1x16xf32> to vector<32x16xf32>
    %88 = arith.addf %85, %87 : vector<32x16xf32>
    %cst_30 = arith.constant 0.000000e+00 : f32
    %89 = vector.broadcast %cst_30 : f32 to vector<32x16xf32>
    %90 = arith.maximumf %88, %89 : vector<32x16xf32>
    %c4_i32 = arith.constant 4 : i32
    %91 = tpu.dynamic_rotate %90 by %c4_i32 dim 0 : vector<32x16xf32>, i32 -> vector<32x16xf32>
    %c4_i32_31 = arith.constant 4 : i32
    %92 = vector.broadcast %c4_i32_31 : i32 to vector<32x16xi32>
    %93 = arith.cmpi sge, %16, %92 : vector<32x16xi32>
    %cst_32 = arith.constant 0.000000e+00 : f32
    %94 = vector.broadcast %cst_32 : f32 to vector<32x16xf32>
    %95 = arith.select %93, %91, %94 : vector<32x16xi1>, vector<32x16xf32>
    %c2_i32_33 = arith.constant 2 : i32
    %96 = tpu.dynamic_rotate %90 by %c2_i32_33 dim 0 : vector<32x16xf32>, i32 -> vector<32x16xf32>
    %c2_i32_34 = arith.constant 2 : i32
    %97 = vector.broadcast %c2_i32_34 : i32 to vector<32x16xi32>
    %98 = arith.cmpi sge, %16, %97 : vector<32x16xi32>
    %cst_35 = arith.constant 0.000000e+00 : f32
    %99 = vector.broadcast %cst_35 : f32 to vector<32x16xf32>
    %100 = arith.select %98, %96, %99 : vector<32x16xi1>, vector<32x16xf32>
    %101 = tpu.concatenate %95, %100, %90 in 1 : vector<32x16xf32>, vector<32x16xf32>, vector<32x16xf32> -> vector<32x48xf32>
    %c88 = arith.constant 88 : index
    %c0_36 = arith.constant 0 : index
    %102 = vector.load %arg1[%c88, %c0_36] : memref<304x128xf32, #tpu.memory_space<vmem>>, vector<48x64xf32>
    %cst_37 = arith.constant dense<0.000000e+00> : vector<32x64xf32>
    %103 = tpu.matmul %101, %102, %cst_37 {dimension_numbers = #tpu.dot_dimension_numbers<[1], [0], [0], [1], [0, 0, 1, 1], [], []>} : vector<32x48xf32>, vector<48x64xf32>, vector<32x64xf32> -> vector<32x64xf32>
    %104 = vector.extract_strided_slice %103 {offsets = [0, 0], sizes = [32, 32], strides = [1, 1]} : vector<32x64xf32> to vector<32x32xf32>
    %c136 = arith.constant 136 : index
    %c0_38 = arith.constant 0 : index
    %105 = vector.load %arg1[%c136, %c0_38] : memref<304x128xf32, #tpu.memory_space<vmem>>, vector<1x32xf32>
    %106 = vector.broadcast %105 : vector<1x32xf32> to vector<32x32xf32>
    %107 = arith.addf %104, %106 : vector<32x32xf32>
    %cst_39 = arith.constant 0.000000e+00 : f32
    %108 = vector.broadcast %cst_39 : f32 to vector<32x32xf32>
    %109 = arith.maximumf %107, %108 : vector<32x32xf32>
    %110 = vector.extract_strided_slice %103 {offsets = [0, 32], sizes = [32, 32], strides = [1, 1]} : vector<32x64xf32> to vector<32x32xf32>
    %c144 = arith.constant 144 : index
    %c0_40 = arith.constant 0 : index
    %111 = vector.load %arg1[%c144, %c0_40] : memref<304x128xf32, #tpu.memory_space<vmem>>, vector<1x32xf32>
    %112 = vector.broadcast %111 : vector<1x32xf32> to vector<32x32xf32>
    %113 = arith.addf %110, %112 : vector<32x32xf32>
    %c4_i32_41 = arith.constant 4 : i32
    %114 = tpu.dynamic_rotate %109 by %c4_i32_41 dim 0 : vector<32x32xf32>, i32 -> vector<32x32xf32>
    %c4_i32_42 = arith.constant 4 : i32
    %115 = vector.broadcast %c4_i32_42 : i32 to vector<32x32xi32>
    %116 = arith.cmpi sge, %33, %115 : vector<32x32xi32>
    %cst_43 = arith.constant 0.000000e+00 : f32
    %117 = vector.broadcast %cst_43 : f32 to vector<32x32xf32>
    %118 = arith.select %116, %114, %117 : vector<32x32xi1>, vector<32x32xf32>
    %c2_i32_44 = arith.constant 2 : i32
    %119 = tpu.dynamic_rotate %109 by %c2_i32_44 dim 0 : vector<32x32xf32>, i32 -> vector<32x32xf32>
    %c2_i32_45 = arith.constant 2 : i32
    %120 = vector.broadcast %c2_i32_45 : i32 to vector<32x32xi32>
    %121 = arith.cmpi sge, %33, %120 : vector<32x32xi32>
    %cst_46 = arith.constant 0.000000e+00 : f32
    %122 = vector.broadcast %cst_46 : f32 to vector<32x32xf32>
    %123 = arith.select %121, %119, %122 : vector<32x32xi1>, vector<32x32xf32>
    %124 = tpu.concatenate %118, %123, %109 in 1 : vector<32x32xf32>, vector<32x32xf32>, vector<32x32xf32> -> vector<32x96xf32>
    %c152 = arith.constant 152 : index
    %c0_47 = arith.constant 0 : index
    %125 = vector.load %arg1[%c152, %c0_47] : memref<304x128xf32, #tpu.memory_space<vmem>>, vector<96x32xf32>
    %cst_48 = arith.constant dense<0.000000e+00> : vector<32x32xf32>
    %126 = tpu.matmul %124, %125, %cst_48 {dimension_numbers = #tpu.dot_dimension_numbers<[1], [0], [0], [1], [0, 0, 1, 1], [], []>} : vector<32x96xf32>, vector<96x32xf32>, vector<32x32xf32> -> vector<32x32xf32>
    %c248 = arith.constant 248 : index
    %c0_49 = arith.constant 0 : index
    %127 = vector.load %arg1[%c248, %c0_49] : memref<304x128xf32, #tpu.memory_space<vmem>>, vector<1x32xf32>
    %128 = vector.broadcast %127 : vector<1x32xf32> to vector<32x32xf32>
    %129 = arith.addf %126, %128 : vector<32x32xf32>
    %cst_50 = arith.constant 0.000000e+00 : f32
    %130 = vector.broadcast %cst_50 : f32 to vector<32x32xf32>
    %131 = arith.maximumf %129, %130 : vector<32x32xf32>
    %132 = arith.addf %131, %113 : vector<32x32xf32>
    %cst_51 = arith.constant 0.000000e+00 : f32
    %133 = vector.broadcast %cst_51 : f32 to vector<32x32xf32>
    %134 = arith.maximumf %132, %133 : vector<32x32xf32>
    %c256 = arith.constant 256 : index
    %c0_52 = arith.constant 0 : index
    %135 = vector.load %arg1[%c256, %c0_52] : memref<304x128xf32, #tpu.memory_space<vmem>>, vector<8x32xf32>
    %cst_53 = arith.constant dense<0.000000e+00> : vector<8x32xf32>
    %136 = tpu.matmul %135, %134, %cst_53 {dimension_numbers = #tpu.dot_dimension_numbers<[1], [0], [0], [1], [0, 0, 1, 1], [], []>} : vector<8x32xf32>, vector<32x32xf32>, vector<8x32xf32> -> vector<8x32xf32>
    %c264 = arith.constant 264 : index
    %c0_54 = arith.constant 0 : index
    %137 = vector.load %arg1[%c264, %c0_54] : memref<304x128xf32, #tpu.memory_space<vmem>>, vector<32x128xf32>
    %cst_55 = arith.constant dense<0.000000e+00> : vector<8x128xf32>
    %138 = tpu.matmul %136, %137, %cst_55 {dimension_numbers = #tpu.dot_dimension_numbers<[1], [0], [0], [1], [0, 0, 1, 1], [], []>} : vector<8x32xf32>, vector<32x128xf32>, vector<8x128xf32> -> vector<8x128xf32>
    %c296 = arith.constant 296 : index
    %c0_56 = arith.constant 0 : index
    %139 = vector.load %arg1[%c296, %c0_56] : memref<304x128xf32, #tpu.memory_space<vmem>>, vector<1x128xf32>
    %140 = vector.broadcast %139 : vector<1x128xf32> to vector<8x128xf32>
    %141 = arith.addf %138, %140 : vector<8x128xf32>
    %c0_57 = arith.constant 0 : index
    %c0_58 = arith.constant 0 : index
    %142 = vector.load %arg2[%c0_57, %c0_58] : memref<8x128xf32, #tpu.memory_space<vmem>>, vector<8x128xf32>
    tpu.vector_store %arg2[%c0_57, %c0_58], %141 {strides = array<i32>} : memref<8x128xf32, #tpu.memory_space<vmem>>, vector<8x128xf32>,
    return
  }
}

</mosaic_0001>

<llo_original>
// kernel: tpu_custom_call.1
$region0: #{tpu_custom_call.1}
  #allocation0 [shape = 'u32[]', space=smem, size = 0x4, offset = 0x4, fixed_abs, tag = 'smem constant byte address 0x4 - core index']
  #allocation1 [shape = 'u32[144,128]{1,0:T(1,128)}', space=vmem, size = 0x12000, scoped, tag = 'internal scratch']
  %s0 = inlined_call_operand.vmem [shape: f32[32,1], index: 0, kind: input, shape index: {}]
  %s1 = inlined_call_operand.hbm [shape: f32[304,128], index: 1, kind: input, shape index: {}]
  %s2 = inlined_call_operand.hbm [shape: f32[8,128], index: 2, kind: output, shape index: {}]
  %s3 = sld [smem:[#allocation0]]
  $region22: #{tpu_custom_call.1} parent=0
    _
  %s5 = ssub.s32 1, %s3
  %s6 = scalar_select 0, %s5, %s3
  $region1: #{tpu_custom_call.1} parent=0
    #allocation2 [shape = 'u8[155648]{0}', space=vmem, size = 0x26000, scoped, tag = 'input window, operand 1, single buffered']
    #allocation3 [shape = 's32[1]{0}', space=sflag, size = 0x4, scoped, tag = 'scoped memory for tpu_custom_call.1']
    #allocation4 [shape = 's32[1]{0}', space=sflag, size = 0x4, scoped, tag = 'scoped memory for tpu_custom_call.1']
    #allocation5 [shape = 'u8[4096]{0}', space=vmem, size = 0x1000, scoped, tag = 'output window, operand 0, single buffered']
    %7 = vsyncpa [#allocation3], 0
    %8 = vsyncpa [#allocation4], 0
    // Predicated region
    $region2: #{tpu_custom_call.1} parent=1 // pred_check
      _
    $region3: #{tpu_custom_call.1} parent=1 // pred_check_branch
      %10 = sbr.rel (0) target = $region5
    $region4: #{tpu_custom_call.1} parent=1 // pred_region
      _
    $region5: #{tpu_custom_call.1} parent=1 // pred_fallthru
      _
    // Predicated region
    $region6: #{tpu_custom_call.1} parent=1 // pred_check
      _
    $region7: #{tpu_custom_call.1} parent=1 // pred_check_branch
      %12 = sbr.rel (0) target = $region9
    $region8: #{tpu_custom_call.1} parent=1 // pred_region
      %s14 = ssub.s32 4864, 4864
      %15 = vsyncadd [#allocation3], %s14
      %s16 = sshll.u32 [#allocation2], 4
      %s17 = int_to_ptr.vmem [resolvable:$true] %s16
      %22 = dma.hbm_to_vmem [thread:$0]  %s1, 4864, %s17, [#allocation3], 128, 128, 8
    $region9: #{tpu_custom_call.1} parent=1 // pred_fallthru
      _
    // Predicated region
    $region10: #{tpu_custom_call.1} parent=1 // pred_check
      _
    $region11: #{tpu_custom_call.1} parent=1 // pred_check_branch
      %24 = sbr.rel (0) target = $region13
    $region12: #{tpu_custom_call.1} parent=1 // pred_region
      %25 = dma.done [#allocation3], 4864
    $region13: #{tpu_custom_call.1} parent=1 // pred_fallthru
      _
    %v26 = vlaneseq
    %v27 = vshrl.u32 %v26, 7
    %v28 = vadd.s32 %v27, 8
    %v29 = vadd.s32 %v27, 16
    %v30 = vadd.s32 %v27, 24
    %vm31 = vcmp.lt.s32.totalorder %v27, 0
    %v32 = vsub.s32 0, %v27
    %v33 = vsel %vm31, %v32, %v27
    %v34 = vshrl.u32 %v33, 4
    %v35 = vand.u32 %v33, 15
    %v36 = vsub.s32 0, %v35
    %v37 = vsel %vm31, %v36, %v35
    %vm38 = vcmp.lt.s32.totalorder %v28, 0
    %v39 = vsub.s32 0, %v28
    %v40 = vsel %vm38, %v39, %v28
    %v41 = vshrl.u32 %v40, 4
    %v42 = vand.u32 %v40, 15
    %v43 = vsub.s32 0, %v42
    %v44 = vsel %vm38, %v43, %v42
    %vm45 = vcmp.lt.s32.totalorder %v29, 0
    %v46 = vsub.s32 0, %v29
    %v47 = vsel %vm45, %v46, %v29
    %v48 = vshrl.u32 %v47, 4
    %v49 = vand.u32 %v47, 15
    %v50 = vsub.s32 0, %v49
    %v51 = vsel %vm45, %v50, %v49
    %vm52 = vcmp.lt.s32.totalorder %v30, 0
    %v53 = vsub.s32 0, %v30
    %v54 = vsel %vm52, %v53, %v30
    %v55 = vshrl.u32 %v54, 4
    %v56 = vand.u32 %v54, 15
    %v57 = vsub.s32 0, %v56
    %v58 = vsel %vm52, %v57, %v56
    %vm59 = vcmp.ne.s32.totalorder %v37, 0
    %vm60 = vcmp.ne.s32.totalorder %v44, 0
    %vm61 = vcmp.ne.s32.totalorder %v51, 0
    %vm62 = vcmp.ne.s32.totalorder %v58, 0
    %vm63 = vcmp.lt.s32.totalorder %v37, 0
    %vm64 = vcmp.lt.s32.totalorder %v44, 0
    %vm65 = vcmp.lt.s32.totalorder %v51, 0
    %vm66 = vcmp.lt.s32.totalorder %v58, 0
    %vm67 = vmand %vm63, %vm59
    %vm68 = vmand %vm64, %vm60
    %vm69 = vmand %vm65, %vm61
    %vm70 = vmand %vm66, %vm62
    %v71 = vadd.s32 %v37, 16
    %v72 = vadd.s32 %v44, 16
    %v73 = vadd.s32 %v51, 16
    %v74 = vadd.s32 %v58, 16
    %v75 = vsel %vm67, %v71, %v37
    %v76 = vsel %vm68, %v72, %v44
    %v77 = vsel %vm69, %v73, %v51
    %v78 = vsel %vm70, %v74, %v58
    %v79 = vld [vmem:[%s0] sm:$0xff]
    %v80 = vld [vmem:[%s0 + $0x8] sm:$0xff]
    %v81 = vld [vmem:[%s0 + $0x10] sm:$0xff]
    %v82 = vld [vmem:[%s0 + $0x18] sm:$0xff]
    %84 = vset.pattern.permute.xlu0 0
    %85 = vperm.xlu0 %84, %v79
    %v86 = vpop.permute.xlu0 %85
    %89 = vset.pattern.permute.xlu0 0
    %90 = vperm.xlu0 %89, %v80
    %v91 = vpop.permute.xlu0 %90
    %94 = vset.pattern.permute.xlu0 0
    %95 = vperm.xlu0 %94, %v81
    %v96 = vpop.permute.xlu0 %95
    %99 = vset.pattern.permute.xlu0 0
    %100 = vperm.xlu0 %99, %v82
    %v101 = vpop.permute.xlu0 %100
    %v103 = vld [vmem:[#allocation2] sm:$0x7]
    %v104 = vld [vmem:[#allocation2 + $0x8] sm:$0x1]
    %v105 = vrot.slane %v86, 6
    %v106 = vrot.slane %v91, 6
    %v107 = vrot.slane %v96, 6
    %v108 = vrot.slane %v101, 6
    %vm109 = vcmp.lt.s32.totalorder %v27, 2
    %v110 = vsel %vm109, %v107, %v108
    %v111 = vsel %vm109, %v106, %v107
    %v112 = vsel %vm109, %v105, %v106
    %v113 = vsel %vm109, %v108, %v105
    %vm114 = vcmp.ge.s32.totalorder %v75, 2
    %vm115 = vcmp.ge.s32.totalorder %v76, 2
    %vm116 = vcmp.ge.s32.totalorder %v77, 2
    %vm117 = vcmp.ge.s32.totalorder %v78, 2
    %v118 = vsel %vm114, %v113, 0.0
    %v119 = vsel %vm115, %v112, 0.0
    %v120 = vsel %vm116, %v111, 0.0
    %v121 = vsel %vm117, %v110, 0.0
    %v122 = vlaneseq
    %v123 = vshrl.u32 %v122, 7
    %v124 = vsub.s32 0, %v123
    %v125 = vrot.slane %v103, %v124
    %v126 = vmul.f32 %v118, %v125
    %v127 = vmul.f32 %v119, %v125
    %v128 = vmul.f32 %v120, %v125
    %v129 = vmul.f32 %v121, %v125
    %v130 = vlaneseq
    %v131 = vshrl.u32 %v130, 7
    %v132 = vsub.s32 0, %v131
    %v133 = vrot.slane %v104, %v132
    %v134 = vadd.f32 %v133, %v126
    %v135 = vadd.f32 %v133, %v127
    %v136 = vadd.f32 %v133, %v128
    %v137 = vadd.f32 %v133, %v129
    %v138 = vrot.slane %v86, 7
    %v139 = vrot.slane %v91, 7
    %v140 = vrot.slane %v96, 7
    %v141 = vrot.slane %v101, 7
    %vm142 = vcmp.lt.s32.totalorder %v27, 1
    %v143 = vsel %vm142, %v140, %v141
    %v144 = vsel %vm142, %v139, %v140
    %v145 = vsel %vm142, %v138, %v139
    %v146 = vsel %vm142, %v141, %v138
    %vm147 = vcmp.ge.s32.totalorder %v75, 1
    %vm148 = vcmp.ge.s32.totalorder %v76, 1
    %vm149 = vcmp.ge.s32.totalorder %v77, 1
    %vm150 = vcmp.ge.s32.totalorder %v78, 1
    %v151 = vsel %vm147, %v146, 0.0
    %v152 = vsel %vm148, %v145, 0.0
    %v153 = vsel %vm149, %v144, 0.0
    %v154 = vsel %vm150, %v143, 0.0
    %v155 = vlaneseq
    %v156 = vshrl.u32 %v155, 7
    %v157 = vsub.s32 1, %v156
    %v158 = vrot.slane %v103, %v157
    %v159 = vmul.f32 %v151, %v158
    %v160 = vmul.f32 %v152, %v158
    %v161 = vmul.f32 %v153, %v158
    %v162 = vmul.f32 %v154, %v158
    %v163 = vadd.f32 %v134, %v159
    %v164 = vadd.f32 %v135, %v160
    %v165 = vadd.f32 %v136, %v161
    %v166 = vadd.f32 %v137, %v162
    %v167 = vlaneseq
    %v168 = vshrl.u32 %v167, 7
    %v169 = vsub.s32 2, %v168
    %v170 = vrot.slane %v103, %v169
    %v171 = vmul.f32 %v86, %v170
    %v172 = vmul.f32 %v91, %v170
    %v173 = vmul.f32 %v96, %v170
    %v174 = vmul.f32 %v101, %v170
    %v175 = vadd.f32 %v163, %v171
    %v176 = vadd.f32 %v164, %v172
    %v177 = vadd.f32 %v165, %v173
    %v178 = vadd.f32 %v166, %v174
    %v179 = vmax.f32 %v175, 0.0
    %v180 = vmax.f32 %v176, 0.0
    %v181 = vmax.f32 %v177, 0.0
    %v182 = vmax.f32 %v178, 0.0
    %v183 = vrot.slane %v179, 6
    %v184 = vrot.slane %v180, 6
    %v185 = vrot.slane %v181, 6
    %v186 = vrot.slane %v182, 6
    %v187 = vsel %vm109, %v185, %v186
    %v188 = vsel %vm109, %v184, %v185
    %v189 = vsel %vm109, %v183, %v184
    %v190 = vsel %vm109, %v186, %v183
    %v191 = vsel %vm114, %v190, 0.0
    %v192 = vsel %vm115, %v189, 0.0
    %v193 = vsel %vm116, %v188, 0.0
    %v194 = vsel %vm117, %v187, 0.0
    %v195 = vrot.slane %v179, 7
    %v196 = vrot.slane %v180, 7
    %v197 = vrot.slane %v181, 7
    %v198 = vrot.slane %v182, 7
    %v199 = vsel %vm142, %v197, %v198
    %v200 = vsel %vm142, %v196, %v197
    %v201 = vsel %vm142, %v195, %v196
    %v202 = vsel %vm142, %v198, %v195
    %v203 = vsel %vm147, %v202, 0.0
    %v204 = vsel %vm148, %v201, 0.0
    %v205 = vsel %vm149, %v200, 0.0
    %v206 = vsel %vm150, %v199, 0.0
    %211 = vrot.lane.b32.xlu0 %v203, 16
    %v212 = vpop.permute.xlu0 %211
    %213 = vrot.lane.b32.xlu0 %v204, 16
    %v214 = vpop.permute.xlu0 %213
    %215 = vrot.lane.b32.xlu0 %v205, 16
    %v216 = vpop.permute.xlu0 %215
    %217 = vrot.lane.b32.xlu0 %v206, 16
    %v218 = vpop.permute.xlu0 %217
    %227 = vrot.lane.b32.xlu0 %v179, 32
    %v228 = vpop.permute.xlu0 %227
    %229 = vrot.lane.b32.xlu0 %v180, 32
    %v230 = vpop.permute.xlu0 %229
    %231 = vrot.lane.b32.xlu0 %v181, 32
    %v232 = vpop.permute.xlu0 %231
    %233 = vrot.lane.b32.xlu0 %v182, 32
    %v234 = vpop.permute.xlu0 %233
    %vm239 = vcmask 130048
    %v240 = vsel %vm239, %v191, %v212
    %v241 = vsel %vm239, %v192, %v214
    %v242 = vsel %vm239, %v193, %v216
    %v243 = vsel %vm239, %v194, %v218
    %vm244 = vcmask 261120
    %v245 = vsel %vm244, %v240, %v228
    %v246 = vsel %vm244, %v241, %v230
    %v247 = vsel %vm244, %v242, %v232
    %v248 = vsel %vm244, %v243, %v234
    %v249 = vld [vmem:[#allocation2 + $0x20] sm:$0xff]
    %v250 = vld [vmem:[#allocation2 + $0x28] sm:$0xff]
    %v251 = vld [vmem:[#allocation2 + $0x30] sm:$0xff]
    %v252 = vld [vmem:[#allocation2 + $0x38] sm:$0xff]
    %v253 = vld [vmem:[#allocation2 + $0x40] sm:$0xff]
    %v254 = vld [vmem:[#allocation2 + $0x48] sm:$0xff]
    %v255 = vld [vmem:[#allocation2 + $0x50] sm:$0x1]
    %v256 = vlaneseq
    %v257 = vshrl.u32 %v256, 7
    %v258 = vsub.s32 0, %v257
    %v259 = vrot.slane %v255, %v258
    %vm260 = vcmask 392192
    %v262 = vsel %vm260, %v245, 0
    %v265 = vsel %vm260, %v246, 0
    %v268 = vsel %vm260, %v247, 0
    %v271 = vsel %vm260, %v248, 0
    %273 = vmatprep.subr.mxu0 0.0
    %274 = vmatpush1.msra.mxu0 %v249
    %275 = vmatprep.subr.mxu0 0.0
    %276 = vmatpush1.msra.mxu0 %v250
    %277 = vmatprep.subr.mxu0 0.0
    %278 = vmatpush1.msra.mxu0 %v251
    %279 = vmatprep.subr.mxu0 0.0
    %280 = vmatpush1.msra.mxu0 %v252
    %281 = vmatprep.subr.mxu0 0.0
    %282 = vmatpush1.msra.mxu0 %v253
    %283 = vmatprep.subr.mxu0 0.0
    %284 = vmatpush1.msra.mxu0 %v254
    %285 = vmatprep.subr.mxu0 0.0
    %286 = vmatpush1.msra.mxu0 0.0
    %287 = vmatprep.subr.mxu0 0.0
    %288 = vmatpush1.msra.mxu0 0.0
    %289 = vmatprep.subr.mxu0 0.0
    %290 = vmatpush1.msra.mxu0 0.0
    %291 = vmatprep.subr.mxu0 0.0
    %292 = vmatpush1.msra.mxu0 0.0
    %293 = vmatprep.subr.mxu0 0.0
    %294 = vmatpush1.msra.mxu0 0.0
    %295 = vmatprep.subr.mxu0 0.0
    %296 = vmatpush1.msra.mxu0 0.0
    %297 = vmatprep.subr.mxu0 0.0
    %298 = vmatpush1.msra.mxu0 0.0
    %299 = vmatprep.subr.mxu0 0.0
    %300 = vmatpush1.msra.mxu0 0.0
    %301 = vmatprep.subr.mxu0 0.0
    %302 = vmatpush1.msra.mxu0 0.0
    %303 = vmatprep.subr.mxu0 0.0
    %304 = vmatpush1.msra.mxu0 0.0
    %305 = vmatprep.subr.mxu0 0.0
    %306 = vmatpush1.msra.mxu0 0.0
    %307 = vmatprep.subr.mxu0 0.0
    %308 = vmatpush1.msra.mxu0 0.0
    %309 = vmatprep.subr.mxu0 0.0
    %310 = vmatpush1.msra.mxu0 0.0
    %311 = vmatprep.subr.mxu0 0.0
    %312 = vmatpush1.msra.mxu0 0.0
    %313 = vmatprep.subr.mxu0 0.0
    %314 = vmatpush1.msra.mxu0 0.0
    %315 = vmatprep.subr.mxu0 0.0
    %316 = vmatpush1.msra.mxu0 0.0
    %317 = vmatprep.subr.mxu0 0.0
    %318 = vmatpush1.msra.mxu0 0.0
    %319 = vmatprep.subr.mxu0 0.0
    %320 = vmatpush1.msra.mxu0 0.0
    %321 = vmatprep.subr.mxu0 0.0
    %322 = vmatpush1.msra.mxu0 0.0
    %323 = vmatprep.subr.mxu0 0.0
    %324 = vmatpush1.msra.mxu0 0.0
    %325 = vmatprep.subr.mxu0 0.0
    %326 = vmatpush1.msra.mxu0 0.0
    %327 = vmatprep.subr.mxu0 0.0
    %328 = vmatpush1.msra.mxu0 0.0
    %329 = vmatprep.subr.mxu0 0.0
    %330 = vmatpush1.msra.mxu0 0.0
    %331 = vmatprep.subr.mxu0 0.0
    %332 = vmatpush1.msra.mxu0 0.0
    %333 = vmatprep.subr.mxu0 0.0
    %334 = vmatpush1.msra.mxu0 0.0
    %335 = vmatprep.subr.mxu0 0.0
    %336 = vmatpush1.msra.mxu0 0.0
    %337 = vmatprep.mubr.f32.mxu0 0.0
    %338 = vmatmul.mubr.f32.gmra.mrb[0].mxu0 %v262
    %v339 = vpop.f32.mrb[0].mxu0
    %v340 = vadd.f32 %v259, %v339
    %v341 = vpop.f32.mrb[0].mxu0
    %342 = vmatprep.mubr.f32.mxu0 0.0
    %343 = vmatmul.mubr.f32.gmra.mrb[0].mxu0 %v265
    %v344 = vpop.f32.mrb[0].mxu0
    %v345 = vadd.f32 %v259, %v344
    %v346 = vpop.f32.mrb[0].mxu0
    %347 = vmatprep.mubr.f32.mxu0 0.0
    %348 = vmatmul.mubr.f32.gmra.mrb[0].mxu0 %v268
    %v349 = vpop.f32.mrb[0].mxu0
    %v350 = vadd.f32 %v259, %v349
    %v351 = vpop.f32.mrb[0].mxu0
    %352 = vmatprep.mubr.f32.mxu0 0.0
    %353 = vmatmul.mubr.f32.gmra.mrb[0].mxu0 %v271
    %v354 = vpop.f32.mrb[0].mxu0
    %v355 = vadd.f32 %v259, %v354
    %v356 = vpop.f32.mrb[0].mxu0
    %357 = vdwg.mxu0
    %v358 = vmax.f32 %v340, 0.0
    %v359 = vmax.f32 %v345, 0.0
    %v360 = vmax.f32 %v350, 0.0
    %v361 = vmax.f32 %v355, 0.0
    %v362 = vld [vmem:[#allocation2 + $0x10] sm:$0x1]
    %v363 = vlaneseq
    %v364 = vshrl.u32 %v363, 7
    %v365 = vsub.s32 0, %v364
    %v366 = vrot.slane %v362, %v365
    %v367 = vmul.f32 %v86, %v366
    %v368 = vmul.f32 %v91, %v366
    %v369 = vmul.f32 %v96, %v366
    %v370 = vmul.f32 %v101, %v366
    %v371 = vadd.f32 %v358, %v367
    %v372 = vadd.f32 %v359, %v368
    %v373 = vadd.f32 %v360, %v369
    %v374 = vadd.f32 %v361, %v370
    %v375 = vld [vmem:[#allocation2 + $0x18] sm:$0x1]
    %v376 = vlaneseq
    %v377 = vshrl.u32 %v376, 7
    %v378 = vsub.s32 0, %v377
    %v379 = vrot.slane %v375, %v378
    %v380 = vadd.f32 %v371, %v379
    %v381 = vadd.f32 %v372, %v379
    %v382 = vadd.f32 %v373, %v379
    %v383 = vadd.f32 %v374, %v379
    %v384 = vmax.f32 %v380, 0.0
    %v385 = vmax.f32 %v381, 0.0
    %v386 = vmax.f32 %v382, 0.0
    %v387 = vmax.f32 %v383, 0.0
    %v388 = vrot.slane %v384, 4
    %v389 = vrot.slane %v385, 4
    %v390 = vrot.slane %v386, 4
    %v391 = vrot.slane %v387, 4
    %vm392 = vcmp.lt.s32.totalorder %v27, 4
    %v393 = vsel %vm392, %v390, %v391
    %v394 = vsel %vm392, %v389, %v390
    %v395 = vsel %vm392, %v388, %v389
    %v396 = vsel %vm392, %v391, %v388
    %vm397 = vcmp.ge.s32.totalorder %v75, 4
    %vm398 = vcmp.ge.s32.totalorder %v76, 4
    %vm399 = vcmp.ge.s32.totalorder %v77, 4
    %vm400 = vcmp.ge.s32.totalorder %v78, 4
    %v401 = vsel %vm397, %v396, 0.0
    %v402 = vsel %vm398, %v395, 0.0
    %v403 = vsel %vm399, %v394, 0.0
    %v404 = vsel %vm400, %v393, 0.0
    %v405 = vrot.slane %v384, 6
    %v406 = vrot.slane %v385, 6
    %v407 = vrot.slane %v386, 6
    %v408 = vrot.slane %v387, 6
    %v409 = vsel %vm109, %v407, %v408
    %v410 = vsel %vm109, %v406, %v407
    %v411 = vsel %vm109, %v405, %v406
    %v412 = vsel %vm109, %v408, %v405
    %v413 = vsel %vm114, %v412, 0.0
    %v414 = vsel %vm115, %v411, 0.0
    %v415 = vsel %vm116, %v410, 0.0
    %v416 = vsel %vm117, %v409, 0.0
    %421 = vrot.lane.b32.xlu0 %v413, 16
    %v422 = vpop.permute.xlu0 %421
    %423 = vrot.lane.b32.xlu0 %v414, 16
    %v424 = vpop.permute.xlu0 %423
    %425 = vrot.lane.b32.xlu0 %v415, 16
    %v426 = vpop.permute.xlu0 %425
    %427 = vrot.lane.b32.xlu0 %v416, 16
    %v428 = vpop.permute.xlu0 %427
    %437 = vrot.lane.b32.xlu0 %v384, 32
    %v438 = vpop.permute.xlu0 %437
    %439 = vrot.lane.b32.xlu0 %v385, 32
    %v440 = vpop.permute.xlu0 %439
    %441 = vrot.lane.b32.xlu0 %v386, 32
    %v442 = vpop.permute.xlu0 %441
    %443 = vrot.lane.b32.xlu0 %v387, 32
    %v444 = vpop.permute.xlu0 %443
    %v449 = vsel %vm239, %v401, %v422
    %v450 = vsel %vm239, %v402, %v424
    %v451 = vsel %vm239, %v403, %v426
    %v452 = vsel %vm239, %v404, %v428
    %v453 = vsel %vm244, %v449, %v438
    %v454 = vsel %vm244, %v450, %v440
    %v455 = vsel %vm244, %v451, %v442
    %v456 = vsel %vm244, %v452, %v444
    %v457 = vld [vmem:[#allocation2 + $0x58] sm:$0xff]
    %v458 = vld [vmem:[#allocation2 + $0x60] sm:$0xff]
    %v459 = vld [vmem:[#allocation2 + $0x68] sm:$0xff]
    %v460 = vld [vmem:[#allocation2 + $0x70] sm:$0xff]
    %v461 = vld [vmem:[#allocation2 + $0x78] sm:$0xff]
    %v462 = vld [vmem:[#allocation2 + $0x80] sm:$0xff]
    %v464 = vsel %vm260, %v453, 0
    %v467 = vsel %vm260, %v454, 0
    %v470 = vsel %vm260, %v455, 0
    %v473 = vsel %vm260, %v456, 0
    %475 = vmatprep.subr.mxu0 0.0
    %476 = vmatpush1.msra.mxu0 %v457
    %477 = vmatprep.subr.mxu0 0.0
    %478 = vmatpush1.msra.mxu0 %v458
    %479 = vmatprep.subr.mxu0 0.0
    %480 = vmatpush1.msra.mxu0 %v459
    %481 = vmatprep.subr.mxu0 0.0
    %482 = vmatpush1.msra.mxu0 %v460
    %483 = vmatprep.subr.mxu0 0.0
    %484 = vmatpush1.msra.mxu0 %v461
    %485 = vmatprep.subr.mxu0 0.0
    %486 = vmatpush1.msra.mxu0 %v462
    %487 = vmatprep.subr.mxu0 0.0
    %488 = vmatpush1.msra.mxu0 0.0
    %489 = vmatprep.subr.mxu0 0.0
    %490 = vmatpush1.msra.mxu0 0.0
    %491 = vmatprep.subr.mxu0 0.0
    %492 = vmatpush1.msra.mxu0 0.0
    %493 = vmatprep.subr.mxu0 0.0
    %494 = vmatpush1.msra.mxu0 0.0
    %495 = vmatprep.subr.mxu0 0.0
    %496 = vmatpush1.msra.mxu0 0.0
    %497 = vmatprep.subr.mxu0 0.0
    %498 = vmatpush1.msra.mxu0 0.0
    %499 = vmatprep.subr.mxu0 0.0
    %500 = vmatpush1.msra.mxu0 0.0
    %501 = vmatprep.subr.mxu0 0.0
    %502 = vmatpush1.msra.mxu0 0.0
    %503 = vmatprep.subr.mxu0 0.0
    %504 = vmatpush1.msra.mxu0 0.0
    %505 = vmatprep.subr.mxu0 0.0
    %506 = vmatpush1.msra.mxu0 0.0
    %507 = vmatprep.subr.mxu0 0.0
    %508 = vmatpush1.msra.mxu0 0.0
    %509 = vmatprep.subr.mxu0 0.0
    %510 = vmatpush1.msra.mxu0 0.0
    %511 = vmatprep.subr.mxu0 0.0
    %512 = vmatpush1.msra.mxu0 0.0
    %513 = vmatprep.subr.mxu0 0.0
    %514 = vmatpush1.msra.mxu0 0.0
    %515 = vmatprep.subr.mxu0 0.0
    %516 = vmatpush1.msra.mxu0 0.0
    %517 = vmatprep.subr.mxu0 0.0
    %518 = vmatpush1.msra.mxu0 0.0
    %519 = vmatprep.subr.mxu0 0.0
    %520 = vmatpush1.msra.mxu0 0.0
    %521 = vmatprep.subr.mxu0 0.0
    %522 = vmatpush1.msra.mxu0 0.0
    %523 = vmatprep.subr.mxu0 0.0
    %524 = vmatpush1.msra.mxu0 0.0
    %525 = vmatprep.subr.mxu0 0.0
    %526 = vmatpush1.msra.mxu0 0.0
    %527 = vmatprep.subr.mxu0 0.0
    %528 = vmatpush1.msra.mxu0 0.0
    %529 = vmatprep.subr.mxu0 0.0
    %530 = vmatpush1.msra.mxu0 0.0
    %531 = vmatprep.subr.mxu0 0.0
    %532 = vmatpush1.msra.mxu0 0.0
    %533 = vmatprep.subr.mxu0 0.0
    %534 = vmatpush1.msra.mxu0 0.0
    %535 = vmatprep.subr.mxu0 0.0
    %536 = vmatpush1.msra.mxu0 0.0
    %537 = vmatprep.subr.mxu0 0.0
    %538 = vmatpush1.msra.mxu0 0.0
    %539 = vmatprep.mubr.f32.mxu0 0.0
    %540 = vmatmul.mubr.f32.gmra.mrb[0].mxu0 %v464
    %v541 = vpop.f32.mrb[0].mxu0
    %v542 = vadd.f32 0.0, %v541
    %v543 = vpop.f32.mrb[0].mxu0
    %544 = vmatprep.mubr.f32.mxu0 0.0
    %545 = vmatmul.mubr.f32.gmra.mrb[0].mxu0 %v467
    %v546 = vpop.f32.mrb[0].mxu0
    %v547 = vadd.f32 0.0, %v546
    %v548 = vpop.f32.mrb[0].mxu0
    %549 = vmatprep.mubr.f32.mxu0 0.0
    %550 = vmatmul.mubr.f32.gmra.mrb[0].mxu0 %v470
    %v551 = vpop.f32.mrb[0].mxu0
    %v552 = vadd.f32 0.0, %v551
    %v553 = vpop.f32.mrb[0].mxu0
    %554 = vmatprep.mubr.f32.mxu0 0.0
    %555 = vmatmul.mubr.f32.gmra.mrb[0].mxu0 %v473
    %v556 = vpop.f32.mrb[0].mxu0
    %v557 = vadd.f32 0.0, %v556
    %v558 = vpop.f32.mrb[0].mxu0
    %559 = vdwg.mxu0
    %v560 = vld [vmem:[#allocation2 + $0x88] sm:$0x1]
    %v561 = vlaneseq
    %v562 = vshrl.u32 %v561, 7
    %v563 = vsub.s32 0, %v562
    %v564 = vrot.slane %v560, %v563
    %v565 = vadd.f32 %v542, %v564
    %v566 = vadd.f32 %v547, %v564
    %v567 = vadd.f32 %v552, %v564
    %v568 = vadd.f32 %v557, %v564
    %v569 = vmax.f32 %v565, 0.0
    %v570 = vmax.f32 %v566, 0.0
    %v571 = vmax.f32 %v567, 0.0
    %v572 = vmax.f32 %v568, 0.0
    %v573 = vld [vmem:[#allocation2 + $0x90] sm:$0x1]
    %v574 = vlaneseq
    %v575 = vshrl.u32 %v574, 7
    %v576 = vsub.s32 0, %v575
    %v577 = vrot.slane %v573, %v576
    %579 = vrot.lane.b32.xlu0 %v577, 32
    %v580 = vpop.permute.xlu0 %579
    %v582 = vadd.f32 %v542, %v580
    %v583 = vadd.f32 %v547, %v580
    %v584 = vadd.f32 %v552, %v580
    %v585 = vadd.f32 %v557, %v580
    %v586 = vrot.slane %v569, 4
    %v587 = vrot.slane %v570, 4
    %v588 = vrot.slane %v571, 4
    %v589 = vrot.slane %v572, 4
    %v590 = vsel %vm392, %v588, %v589
    %v591 = vsel %vm392, %v587, %v588
    %v592 = vsel %vm392, %v586, %v587
    %v593 = vsel %vm392, %v589, %v586
    %v594 = vsel %vm397, %v593, 0.0
    %v595 = vsel %vm398, %v592, 0.0
    %v596 = vsel %vm399, %v591, 0.0
    %v597 = vsel %vm400, %v590, 0.0
    %v598 = vrot.slane %v569, 6
    %v599 = vrot.slane %v570, 6
    %v600 = vrot.slane %v571, 6
    %v601 = vrot.slane %v572, 6
    %v602 = vsel %vm109, %v600, %v601
    %v603 = vsel %vm109, %v599, %v600
    %v604 = vsel %vm109, %v598, %v599
    %v605 = vsel %vm109, %v601, %v598
    %v606 = vsel %vm114, %v605, 0.0
    %v607 = vsel %vm115, %v604, 0.0
    %v608 = vsel %vm116, %v603, 0.0
    %v609 = vsel %vm117, %v602, 0.0
    %614 = vrot.lane.b32.xlu0 %v606, 32
    %v615 = vpop.permute.xlu0 %614
    %616 = vrot.lane.b32.xlu0 %v607, 32
    %v617 = vpop.permute.xlu0 %616
    %618 = vrot.lane.b32.xlu0 %v608, 32
    %v619 = vpop.permute.xlu0 %618
    %620 = vrot.lane.b32.xlu0 %v609, 32
    %v621 = vpop.permute.xlu0 %620
    %630 = vrot.lane.b32.xlu0 %v569, 64
    %v631 = vpop.permute.xlu0 %630
    %632 = vrot.lane.b32.xlu0 %v570, 64
    %v633 = vpop.permute.xlu0 %632
    %634 = vrot.lane.b32.xlu0 %v571, 64
    %v635 = vpop.permute.xlu0 %634
    %636 = vrot.lane.b32.xlu0 %v572, 64
    %v637 = vpop.permute.xlu0 %636
    %v642 = vsel %vm244, %v594, %v615
    %v643 = vsel %vm244, %v595, %v617
    %v644 = vsel %vm244, %v596, %v619
    %v645 = vsel %vm244, %v597, %v621
    %vm646 = vcmask 523264
    %v647 = vsel %vm646, %v642, %v631
    %v648 = vsel %vm646, %v643, %v633
    %v649 = vsel %vm646, %v644, %v635
    %v650 = vsel %vm646, %v645, %v637
    %v651 = vld [vmem:[#allocation2 + $0x98] sm:$0xff]
    %v652 = vld [vmem:[#allocation2 + $0xa0] sm:$0xff]
    %v653 = vld [vmem:[#allocation2 + $0xa8] sm:$0xff]
    %v654 = vld [vmem:[#allocation2 + $0xb0] sm:$0xff]
    %v655 = vld [vmem:[#allocation2 + $0xb8] sm:$0xff]
    %v656 = vld [vmem:[#allocation2 + $0xc0] sm:$0xff]
    %v657 = vld [vmem:[#allocation2 + $0xc8] sm:$0xff]
    %v658 = vld [vmem:[#allocation2 + $0xd0] sm:$0xff]
    %v659 = vld [vmem:[#allocation2 + $0xd8] sm:$0xff]
    %v660 = vld [vmem:[#allocation2 + $0xe0] sm:$0xff]
    %v661 = vld [vmem:[#allocation2 + $0xe8] sm:$0xff]
    %v662 = vld [vmem:[#allocation2 + $0xf0] sm:$0xff]
    %v663 = vld [vmem:[#allocation2 + $0xf8] sm:$0x1]
    %v664 = vlaneseq
    %v665 = vshrl.u32 %v664, 7
    %v666 = vsub.s32 0, %v665
    %v667 = vrot.slane %v663, %v666
    %vm668 = vcmask 785408
    %v670 = vsel %vm668, %v647, 0
    %v673 = vsel %vm668, %v648, 0
    %v676 = vsel %vm668, %v649, 0
    %v679 = vsel %vm668, %v650, 0
    %681 = vmatprep.subr.mxu0 0.0
    %682 = vmatpush1.msra.mxu0 %v651
    %683 = vmatprep.subr.mxu0 0.0
    %684 = vmatpush1.msra.mxu0 %v652
    %685 = vmatprep.subr.mxu0 0.0
    %686 = vmatpush1.msra.mxu0 %v653
    %687 = vmatprep.subr.mxu0 0.0
    %688 = vmatpush1.msra.mxu0 %v654
    %689 = vmatprep.subr.mxu0 0.0
    %690 = vmatpush1.msra.mxu0 %v655
    %691 = vmatprep.subr.mxu0 0.0
    %692 = vmatpush1.msra.mxu0 %v656
    %693 = vmatprep.subr.mxu0 0.0
    %694 = vmatpush1.msra.mxu0 %v657
    %695 = vmatprep.subr.mxu0 0.0
    %696 = vmatpush1.msra.mxu0 %v658
    %697 = vmatprep.subr.mxu0 0.0
    %698 = vmatpush1.msra.mxu0 %v659
    %699 = vmatprep.subr.mxu0 0.0
    %700 = vmatpush1.msra.mxu0 %v660
    %701 = vmatprep.subr.mxu0 0.0
    %702 = vmatpush1.msra.mxu0 %v661
    %703 = vmatprep.subr.mxu0 0.0
    %704 = vmatpush1.msra.mxu0 %v662
    %705 = vmatprep.subr.mxu0 0.0
    %706 = vmatpush1.msra.mxu0 0.0
    %707 = vmatprep.subr.mxu0 0.0
    %708 = vmatpush1.msra.mxu0 0.0
    %709 = vmatprep.subr.mxu0 0.0
    %710 = vmatpush1.msra.mxu0 0.0
    %711 = vmatprep.subr.mxu0 0.0
    %712 = vmatpush1.msra.mxu0 0.0
    %713 = vmatprep.subr.mxu0 0.0
    %714 = vmatpush1.msra.mxu0 0.0
    %715 = vmatprep.subr.mxu0 0.0
    %716 = vmatpush1.msra.mxu0 0.0
    %717 = vmatprep.subr.mxu0 0.0
    %718 = vmatpush1.msra.mxu0 0.0
    %719 = vmatprep.subr.mxu0 0.0
    %720 = vmatpush1.msra.mxu0 0.0
    %721 = vmatprep.subr.mxu0 0.0
    %722 = vmatpush1.msra.mxu0 0.0
    %723 = vmatprep.subr.mxu0 0.0
    %724 = vmatpush1.msra.mxu0 0.0
    %725 = vmatprep.subr.mxu0 0.0
    %726 = vmatpush1.msra.mxu0 0.0
    %727 = vmatprep.subr.mxu0 0.0
    %728 = vmatpush1.msra.mxu0 0.0
    %729 = vmatprep.subr.mxu0 0.0
    %730 = vmatpush1.msra.mxu0 0.0
    %731 = vmatprep.subr.mxu0 0.0
    %732 = vmatpush1.msra.mxu0 0.0
    %733 = vmatprep.subr.mxu0 0.0
    %734 = vmatpush1.msra.mxu0 0.0
    %735 = vmatprep.subr.mxu0 0.0
    %736 = vmatpush1.msra.mxu0 0.0
    %737 = vmatprep.subr.mxu0 0.0
    %738 = vmatpush1.msra.mxu0 0.0
    %739 = vmatprep.subr.mxu0 0.0
    %740 = vmatpush1.msra.mxu0 0.0
    %741 = vmatprep.subr.mxu0 0.0
    %742 = vmatpush1.msra.mxu0 0.0
    %743 = vmatprep.subr.mxu0 0.0
    %744 = vmatpush1.msra.mxu0 0.0
    %745 = vmatprep.mubr.f32.mxu0 0.0
    %746 = vmatmul.mubr.f32.gmra.mrb[0].mxu0 %v670
    %v747 = vpop.f32.mrb[0].mxu0
    %v748 = vadd.f32 %v667, %v747
    %v749 = vpop.f32.mrb[0].mxu0
    %750 = vmatprep.mubr.f32.mxu0 0.0
    %751 = vmatmul.mubr.f32.gmra.mrb[0].mxu0 %v673
    %v752 = vpop.f32.mrb[0].mxu0
    %v753 = vadd.f32 %v667, %v752
    %v754 = vpop.f32.mrb[0].mxu0
    %755 = vmatprep.mubr.f32.mxu0 0.0
    %756 = vmatmul.mubr.f32.gmra.mrb[0].mxu0 %v676
    %v757 = vpop.f32.mrb[0].mxu0
    %v758 = vadd.f32 %v667, %v757
    %v759 = vpop.f32.mrb[0].mxu0
    %760 = vmatprep.mubr.f32.mxu0 0.0
    %761 = vmatmul.mubr.f32.gmra.mrb[0].mxu0 %v679
    %v762 = vpop.f32.mrb[0].mxu0
    %v763 = vadd.f32 %v667, %v762
    %v764 = vpop.f32.mrb[0].mxu0
    %765 = vdwg.mxu0
    %v766 = vmax.f32 %v748, 0.0
    %v767 = vmax.f32 %v753, 0.0
    %v768 = vmax.f32 %v758, 0.0
    %v769 = vmax.f32 %v763, 0.0
    %774 = vrot.lane.b32.xlu0 %v582, 96
    %v775 = vpop.permute.xlu0 %774
    %776 = vrot.lane.b32.xlu0 %v583, 96
    %v777 = vpop.permute.xlu0 %776
    %778 = vrot.lane.b32.xlu0 %v584, 96
    %v779 = vpop.permute.xlu0 %778
    %780 = vrot.lane.b32.xlu0 %v585, 96
    %v781 = vpop.permute.xlu0 %780
    %v786 = vadd.f32 %v766, %v775
    %v787 = vadd.f32 %v767, %v777
    %v788 = vadd.f32 %v768, %v779
    %v789 = vadd.f32 %v769, %v781
    %v790 = vmax.f32 %v786, 0.0
    %v791 = vmax.f32 %v787, 0.0
    %v792 = vmax.f32 %v788, 0.0
    %v793 = vmax.f32 %v789, 0.0
    %v794 = vld [vmem:[#allocation2 + $0x100] sm:$0xff]
    %v796 = vsel %vm244, %v794, 0
    %798 = vmatprep.subr.mxu0 0.0
    %799 = vmatpush1.msra.mxu0 %v790
    %800 = vmatprep.subr.mxu0 0.0
    %801 = vmatpush1.msra.mxu0 %v791
    %802 = vmatprep.subr.mxu0 0.0
    %803 = vmatpush1.msra.mxu0 %v792
    %804 = vmatprep.subr.mxu0 0.0
    %805 = vmatpush1.msra.mxu0 %v793
    %806 = vmatprep.subr.mxu0 0.0
    %807 = vmatpush1.msra.mxu0 0.0
    %808 = vmatprep.subr.mxu0 0.0
    %809 = vmatpush1.msra.mxu0 0.0
    %810 = vmatprep.subr.mxu0 0.0
    %811 = vmatpush1.msra.mxu0 0.0
    %812 = vmatprep.subr.mxu0 0.0
    %813 = vmatpush1.msra.mxu0 0.0
    %814 = vmatprep.subr.mxu0 0.0
    %815 = vmatpush1.msra.mxu0 0.0
    %816 = vmatprep.subr.mxu0 0.0
    %817 = vmatpush1.msra.mxu0 0.0
    %818 = vmatprep.subr.mxu0 0.0
    %819 = vmatpush1.msra.mxu0 0.0
    %820 = vmatprep.subr.mxu0 0.0
    %821 = vmatpush1.msra.mxu0 0.0
    %822 = vmatprep.subr.mxu0 0.0
    %823 = vmatpush1.msra.mxu0 0.0
    %824 = vmatprep.subr.mxu0 0.0
    %825 = vmatpush1.msra.mxu0 0.0
    %826 = vmatprep.subr.mxu0 0.0
    %827 = vmatpush1.msra.mxu0 0.0
    %828 = vmatprep.subr.mxu0 0.0
    %829 = vmatpush1.msra.mxu0 0.0
    %830 = vmatprep.subr.mxu0 0.0
    %831 = vmatpush1.msra.mxu0 0.0
    %832 = vmatprep.subr.mxu0 0.0
    %833 = vmatpush1.msra.mxu0 0.0
    %834 = vmatprep.subr.mxu0 0.0
    %835 = vmatpush1.msra.mxu0 0.0
    %836 = vmatprep.subr.mxu0 0.0
    %837 = vmatpush1.msra.mxu0 0.0
    %838 = vmatprep.subr.mxu0 0.0
    %839 = vmatpush1.msra.mxu0 0.0
    %840 = vmatprep.subr.mxu0 0.0
    %841 = vmatpush1.msra.mxu0 0.0
    %842 = vmatprep.subr.mxu0 0.0
    %843 = vmatpush1.msra.mxu0 0.0
    %844 = vmatprep.subr.mxu0 0.0
    %845 = vmatpush1.msra.mxu0 0.0
    %846 = vmatprep.subr.mxu0 0.0
    %847 = vmatpush1.msra.mxu0 0.0
    %848 = vmatprep.subr.mxu0 0.0
    %849 = vmatpush1.msra.mxu0 0.0
    %850 = vmatprep.subr.mxu0 0.0
    %851 = vmatpush1.msra.mxu0 0.0
    %852 = vmatprep.subr.mxu0 0.0
    %853 = vmatpush1.msra.mxu0 0.0
    %854 = vmatprep.subr.mxu0 0.0
    %855 = vmatpush1.msra.mxu0 0.0
    %856 = vmatprep.subr.mxu0 0.0
    %857 = vmatpush1.msra.mxu0 0.0
    %858 = vmatprep.subr.mxu0 0.0
    %859 = vmatpush1.msra.mxu0 0.0
    %860 = vmatprep.subr.mxu0 0.0
    %861 = vmatpush1.msra.mxu0 0.0
    %862 = vmatprep.mubr.f32.mxu0 0.0
    %863 = vmatmul.mubr.f32.gmra.mrb[0].mxu0 %v796
    %v864 = vpop.f32.mrb[0].mxu0
    %v865 = vadd.f32 0.0, %v864
    %v866 = vpop.f32.mrb[0].mxu0
    %867 = vdwg.mxu0
    %v868 = vld [vmem:[#allocation2 + $0x108] sm:$0xff]
    %v869 = vld [vmem:[#allocation2 + $0x110] sm:$0xff]
    %v870 = vld [vmem:[#allocation2 + $0x118] sm:$0xff]
    %v871 = vld [vmem:[#allocation2 + $0x120] sm:$0xff]
    %v872 = vld [vmem:[#allocation2 + $0x128] sm:$0x1]
    %v873 = vlaneseq
    %v874 = vshrl.u32 %v873, 7
    %v875 = vsub.s32 0, %v874
    %v876 = vrot.slane %v872, %v875
    %v878 = vsel %vm244, %v865, 0
    %880 = vmatprep.subr.mxu0 0.0
    %881 = vmatpush1.msra.mxu0 %v868
    %882 = vmatprep.subr.mxu0 0.0
    %883 = vmatpush1.msra.mxu0 %v869
    %884 = vmatprep.subr.mxu0 0.0
    %885 = vmatpush1.msra.mxu0 %v870
    %886 = vmatprep.subr.mxu0 0.0
    %887 = vmatpush1.msra.mxu0 %v871
    %888 = vmatprep.subr.mxu0 0.0
    %889 = vmatpush1.msra.mxu0 0.0
    %890 = vmatprep.subr.mxu0 0.0
    %891 = vmatpush1.msra.mxu0 0.0
    %892 = vmatprep.subr.mxu0 0.0
    %893 = vmatpush1.msra.mxu0 0.0
    %894 = vmatprep.subr.mxu0 0.0
    %895 = vmatpush1.msra.mxu0 0.0
    %896 = vmatprep.subr.mxu0 0.0
    %897 = vmatpush1.msra.mxu0 0.0
    %898 = vmatprep.subr.mxu0 0.0
    %899 = vmatpush1.msra.mxu0 0.0
    %900 = vmatprep.subr.mxu0 0.0
    %901 = vmatpush1.msra.mxu0 0.0
    %902 = vmatprep.subr.mxu0 0.0
    %903 = vmatpush1.msra.mxu0 0.0
    %904 = vmatprep.subr.mxu0 0.0
    %905 = vmatpush1.msra.mxu0 0.0
    %906 = vmatprep.subr.mxu0 0.0
    %907 = vmatpush1.msra.mxu0 0.0
    %908 = vmatprep.subr.mxu0 0.0
    %909 = vmatpush1.msra.mxu0 0.0
    %910 = vmatprep.subr.mxu0 0.0
    %911 = vmatpush1.msra.mxu0 0.0
    %912 = vmatprep.subr.mxu0 0.0
    %913 = vmatpush1.msra.mxu0 0.0
    %914 = vmatprep.subr.mxu0 0.0
    %915 = vmatpush1.msra.mxu0 0.0
    %916 = vmatprep.subr.mxu0 0.0
    %917 = vmatpush1.msra.mxu0 0.0
    %918 = vmatprep.subr.mxu0 0.0
    %919 = vmatpush1.msra.mxu0 0.0
    %920 = vmatprep.subr.mxu0 0.0
    %921 = vmatpush1.msra.mxu0 0.0
    %922 = vmatprep.subr.mxu0 0.0
    %923 = vmatpush1.msra.mxu0 0.0
    %924 = vmatprep.subr.mxu0 0.0
    %925 = vmatpush1.msra.mxu0 0.0
    %926 = vmatprep.subr.mxu0 0.0
    %927 = vmatpush1.msra.mxu0 0.0
    %928 = vmatprep.subr.mxu0 0.0
    %929 = vmatpush1.msra.mxu0 0.0
    %930 = vmatprep.subr.mxu0 0.0
    %931 = vmatpush1.msra.mxu0 0.0
    %932 = vmatprep.subr.mxu0 0.0
    %933 = vmatpush1.msra.mxu0 0.0
    %934 = vmatprep.subr.mxu0 0.0
    %935 = vmatpush1.msra.mxu0 0.0
    %936 = vmatprep.subr.mxu0 0.0
    %937 = vmatpush1.msra.mxu0 0.0
    %938 = vmatprep.subr.mxu0 0.0
    %939 = vmatpush1.msra.mxu0 0.0
    %940 = vmatprep.subr.mxu0 0.0
    %941 = vmatpush1.msra.mxu0 0.0
    %942 = vmatprep.subr.mxu0 0.0
    %943 = vmatpush1.msra.mxu0 0.0
    %944 = vmatprep.mubr.f32.mxu0 0.0
    %945 = vmatmul.mubr.f32.gmra.mrb[0].mxu0 %v878
    %v946 = vpop.f32.mrb[0].mxu0
    %v947 = vadd.f32 %v876, %v946
    %v948 = vpop.f32.mrb[0].mxu0
    %949 = vdwg.mxu0
    %950 = vst [vmem:[#allocation5] sm:$0xff] %v947
    // Predicated region
    $region14: #{tpu_custom_call.1} parent=1 // pred_check
      _
    $region15: #{tpu_custom_call.1} parent=1 // pred_check_branch
      %952 = sbr.rel (0) target = $region17
    $region16: #{tpu_custom_call.1} parent=1 // pred_region
      %s954 = ssub.s32 128, 128
      %955 = vsyncadd [#allocation4], %s954
      %s957 = sshll.u32 [#allocation5], 4
      %s958 = int_to_ptr.vmem [resolvable:$true] %s957
      %960 = dma.vmem_to_hbm [thread:$0]  %s958, 128, %s2, [#allocation4]
    $region17: #{tpu_custom_call.1} parent=1 // pred_fallthru
      _
    // Predicated region
    $region18: #{tpu_custom_call.1} parent=1 // pred_check
      _
    $region19: #{tpu_custom_call.1} parent=1 // pred_check_branch
      %962 = sbr.rel (0) target = $region21
    $region20: #{tpu_custom_call.1} parent=1 // pred_region
      %963 = dma.done [#allocation4], 128
    $region21: #{tpu_custom_call.1} parent=1 // pred_fallthru
      _
    %964 = vsyncpa [#allocation3], 1
    %965 = vsyncpa [#allocation4], 1

</llo_original>
